<compile_context>
chip_gen: v7x
topology: tpu7x:2x2x1
jax: 0.10.0
libtpu: 0.0.40
codegen_flags: <defaults>
</compile_context>

<pallas_src>
import functools

import jax
import jax.numpy as jnp
from jax import lax
from jax.experimental import pallas as pl
from jax.experimental.pallas import tpu as pltpu


def _round_up(x, m):
    return ((x + m - 1) // m) * m


# ---------------------------------------------------------------------------
# Kernel: streaming sum_over_valid_rows(logsumexp) over vocab tiles
#   grid = (n_row_tiles [parallel], n_vocab_tiles [arbitrary, last])
# ---------------------------------------------------------------------------
def _lse_sum_kernel(ht_ref, wt_ref, valid_ref, out_ref, m_sc, l_sc, *,
                    v2, tv, needs_mask):
    kv = pl.program_id(1)

    @pl.when(kv == 0)
    def _():
        m_sc[...] = jnp.full_like(m_sc, -1e30)
        l_sc[...] = jnp.zeros_like(l_sc)

    ht = ht_ref[...]                 # (TM, E) bf16
    wt = wt_ref[...]                 # (E, TV) bf16, pre-transposed (lane-dense over vocab)
    # natural (TM,E)x(E,TV) contraction on the MXU, f32 accumulation
    logits = jnp.dot(ht, wt, preferred_element_type=jnp.float32)   # (TM, TV)

    if needs_mask:
        # only compiled in when V2 % TV != 0; local iota vs scalar threshold,
        # no global column id materialized.
        lim = v2 - kv * tv
        lane = lax.broadcasted_iota(jnp.int32, logits.shape, 1)
        logits = jnp.where(lane < lim, logits, -1e30)

    # online logsumexp update (f32)
    m_new = jnp.maximum(m_sc[...], jnp.max(logits, axis=1, keepdims=True))
    alpha = jnp.exp(m_sc[...] - m_new)
    # TODO(synk): on v6e/v7x a bf16 exp here (~2x EUP rate) is viable; kept f32 for v5e parity.
    l_sc[...] = alpha * l_sc[...] + jnp.sum(jnp.exp(logits - m_new),
                                            axis=1, keepdims=True)
    m_sc[...] = m_new

    @pl.when(kv == pl.num_programs(1) - 1)
    def _():
        lse = m_sc[...] + jnp.log(l_sc[...])          # (TM, 1)
        part = jnp.sum(valid_ref[...] * lse)          # per-row-tile partial (ignore_index mask)
        # single lane-dense (8,128) store of the partial sum
        out_ref[...] = part + jnp.zeros(out_ref.shape, jnp.float32)


# ---------------------------------------------------------------------------
# Wrapper pieces
# ---------------------------------------------------------------------------
def prep_output_weight(emb_weight, *, tv=None):
    """Hoisted out of the per-call path: W[2:] -> transposed, bf16, vocab-padded (E, V2_pad).

    Keep the returned tuple persistent across forward calls.
    """
    V, E = emb_weight.shape
    v2 = V - 2
    if tv is None:
        tv = 512                                        # <=512 also respects v5e store budget
    tv = max(128, _round_up(min(int(tv), _round_up(v2, 128)), 128))
    v2_pad = _round_up(v2, tv)
    assert 0 <= v2_pad - v2 < tv                        # no vocab tile is entirely padding
    w2t = jnp.pad(emb_weight[2:].T.astype(jnp.bfloat16), ((0, 0), (0, v2_pad - v2)))
    return w2t, v2, tv


def _valid_lse_sum(ht, w2t, v2, tv, valid, *, tm=None):
    """sum over valid rows of logsumexp(ht @ W2^T), streaming over vocab tiles."""
    N, E = ht.shape
    Ew, v2_pad = w2t.shape
    assert Ew == E and v2_pad % tv == 0 and 0 <= v2_pad - v2 < tv
    n_voc = v2_pad // tv

    # Row tile: big (default 512) to cut weight re-streaming, but keep >= 2 row
    # tiles so the parallel axis can split across v7x's two TensorCores.
    n_pad_min = _round_up(N, 8)
    if tm is None:
        tm = 512
    tm = max(8, min(_round_up(int(tm), 8), n_pad_min))
    if n_pad_min > 8 and n_pad_min <= tm:
        tm = max(8, _round_up((N + 1) // 2, 8))
    n_pad = _round_up(N, tm)
    n_row = n_pad // tm

    ht_b = jnp.pad(ht.astype(jnp.bfloat16), ((0, n_pad - N), (0, 0)))
    valid_p = jnp.pad(valid.astype(jnp.float32), (0, n_pad - N)).reshape(-1, 1)

    # VMEM budget: double-buffered ht/weight slabs + logits working set + scratch.
    est_vmem = (2 * tm * E * 2) + (2 * E * tv * 2) + (2 * tm * 4) \
               + (2 * 8 * 128 * 4) + (2 * tm * 4) + (tm * tv * 4)
    try:
        phys = int(pltpu.get_tpu_info().vmem_capacity_bytes)
    except Exception:
        phys = 128 * 1024 * 1024
    vmem_limit = int(min(min(64 * 1024 * 1024, (3 * phys) // 4),
                         max(32 * 1024 * 1024, 2 * est_vmem)))

    kernel = functools.partial(_lse_sum_kernel, v2=v2, tv=tv,
                               needs_mask=(v2_pad != v2))
    cost = pl.CostEstimate(
        flops=2 * n_pad * v2_pad * E,
        transcendentals=n_pad * v2_pad,
        bytes_accessed=(ht_b.size * 2 + w2t.size * 2 * n_row
                        + valid_p.size * 4 + n_row * 8 * 128 * 4),
    )

    partial = pl.pallas_call(
        kernel,
        out_shape=jax.ShapeDtypeStruct((n_row * 8, 128), jnp.float32),
        grid_spec=pltpu.PrefetchScalarGridSpec(
            num_scalar_prefetch=0,
            grid=(n_row, n_voc),
            in_specs=[
                pl.BlockSpec((tm, E), lambda i, k: (i, 0)),   # ht rows (resident across k)
                pl.BlockSpec((E, tv), lambda i, k: (0, k)),   # transposed weight slab (streamed)
                pl.BlockSpec((tm, 1), lambda i, k: (i, 0)),   # validity mask (ignore_index=-1)
            ],
            out_specs=pl.BlockSpec((8, 128), lambda i, k: (i, 0)),
            scratch_shapes=[
                pltpu.VMEM((tm, 1), jnp.float32),   # running max
                pltpu.VMEM((tm, 1), jnp.float32),   # running exp-sum
            ],
        ),
        compiler_params=pltpu.CompilerParams(
            dimension_semantics=("parallel", "arbitrary"),
            vmem_limit_bytes=vmem_limit,
        ),
        cost_estimate=cost,
    )(ht_b, w2t, valid_p)

    # each (8,128) block holds one per-row-tile partial replicated; take one lane.
    return jnp.sum(partial.reshape(n_row, 8, 128)[:, 0, 0])


def _target_logit_sum(ht, emb_weight, tgt):
    # target logit via O(N*E) row gather + row-wise dot (moved out of the kernel);
    # bf16 operands to match the kernel's MXU dtype, f32 accumulation.
    valid = tgt != -1
    safe = jnp.where(valid, tgt, 0) + 2
    w_rows = jnp.take(emb_weight, safe, axis=0)                       # (N, E)
    prods = (ht.astype(jnp.bfloat16).astype(jnp.float32)
             * w_rows.astype(jnp.bfloat16).astype(jnp.float32))
    tl = jnp.sum(prods, axis=-1)
    return jnp.sum(jnp.where(valid, tl, 0.0))


def output_layer_xent_sum(ht, emb_weight, targets, *, tm=None, tv=None, prepped_w=None):
    """ht: (N,E); emb_weight: (V,E); targets: (N,) int (ignore = -1) -> (1,) f32 loss sum."""
    if prepped_w is None:
        prepped_w = prep_output_weight(emb_weight, tv=tv)
    w2t, v2, tv_eff = prepped_w
    tgt = targets.astype(jnp.int32)
    valid = tgt != -1
    lse_sum = _valid_lse_sum(ht, w2t, v2, tv_eff, valid, tm=tm)
    return (lse_sum - _target_logit_sum(ht, emb_weight, tgt)).reshape(1)


# ---------------------------------------------------------------------------
# Glue reproducing the module's python-side plumbing (eval mode)
# ---------------------------------------------------------------------------
def word_embedding_forward(emb_weights, lang):
    # Word_Embedding.forward(lang): emb_dropout(W_emb) -> identity in eval mode
    return emb_weights[lang]


def shared_mt_embedding(emb_weights, emb_size, s_id, lang):
    # Shared_MT.embedding: cat([zeros(1,E), W[1:]]) == zero row 0 in place (no table copy)
    W = word_embedding_forward(emb_weights, lang)                     # (V, E)
    emb_w = W.at[0].set(0.0)
    bs, max_len = s_id.shape
    s_id_emb = jnp.take(emb_w, s_id.reshape(-1), axis=0).reshape(bs, max_len, emb_size)
    return s_id_emb, emb_w


def shared_mt_forward_lm(emb_weights, t_id, t_id_eos, tgt_lang, emb_size, *,
                         tm=None, tv=None, prepped_w=None):
    # Shared_MT.forward with s_id == None  ->  decode_LM path
    t_id_emb, emb_weight = shared_mt_embedding(emb_weights, emb_size, t_id, tgt_lang)
    # TODO(synk): self.decoder._decode_LM is an injected external module (not defined in
    # new_models.py); stubbed as an identity pass-through on the embeddings here.
    ht = t_id_emb.reshape(-1, emb_size)                               # (bs*len, E)
    return output_layer_xent_sum(ht, emb_weight, t_id_eos.reshape(-1),
                                 tm=tm, tv=tv, prepped_w=prepped_w)


# ---------------------------------------------------------------------------
# Deterministic synthetic setup + reference check
# ---------------------------------------------------------------------------
def main():
    key = jax.random.PRNGKey(0)
    V = 300          # vocab_dict.V_size[lang] + len(shared_V)
    E = 32           # emb_size
    bs, max_len = 2, 8
    tgt_lang = 0

    # nn.Embedding init ~ N(0,1), padding_idx=0 row zeroed.
    kw0, kw1, kid, keos = jax.random.split(key, 4)
    w0 = jax.random.normal(kw0, (V, E), jnp.float32).at[0].set(0.0)
    w1 = jax.random.normal(kw1, (V, E), jnp.float32).at[0].set(0.0)
    emb_weights = [w0, w1]

    t_id = jax.random.randint(kid, (bs, max_len), 0, V)
    t_id_eos = jax.random.randint(keos, (bs, max_len), 0, V - 2)
    # sprinkle ignore_index=-1 (padding positions)
    t_id_eos = t_id_eos.at[0, -1].set(-1).at[1, -2:].set(-1)

    # hoisted weight prep (transpose + bf16 + pad), done ONCE and reused per call
    prepped_w = prep_output_weight(emb_weights[tgt_lang], tv=128)

    # small tiles so the grid actually iterates: (2 row tiles) x (3 vocab tiles)
    loss = shared_mt_forward_lm(emb_weights, t_id, t_id_eos, tgt_lang, E,
                                tm=8, prepped_w=prepped_w)
    loss = jax.block_until_ready(loss)
    assert loss.shape == (1,)

    # references
    t_emb, emb_w = shared_mt_embedding(emb_weights, E, t_id, tgt_lang)
    ht = t_emb.reshape(-1, E)
    tgt = t_id_eos.reshape(-1)
    safe_tgt = jnp.where(tgt == -1, 0, tgt)

    def ce_sum(logits):
        lse = jax.nn.logsumexp(logits, axis=1)
        tgt_logit = jnp.take_along_axis(logits, safe_tgt[:, None], axis=1)[:, 0]
        return jnp.sum(jnp.where(tgt == -1, 0.0, lse - tgt_logit)).reshape(1)

    # bf16-operand reference (same matmul dtype as the kernel)
    logits_bf16 = jnp.dot(ht.astype(jnp.bfloat16), emb_w[2:].astype(jnp.bfloat16).T,
                          preferred_element_type=jnp.float32)
    ref_b = ce_sum(logits_bf16)
    # full-f32 reference (PyTorch semantics)
    ref_f = ce_sum(ht @ emb_w[2:].T)

    assert jnp.allclose(loss, ref_b, rtol=2e-3, atol=1e-2), (loss, ref_b)
    assert jnp.allclose(loss, ref_f, rtol=2e-2, atol=0.5), (loss, ref_f)
    print("KERNEL_OK")


if __name__ == "__main__":
    main()
</pallas_src>

<mosaic_0001>
module attributes {stable_mosaic.version = 11 : i64} {
  func.func @_lse_sum_kernel(%arg0: i32, %arg1: i32, %arg2: memref<8x32xbf16, #tpu.memory_space<vmem>>, %arg3: memref<32x128xbf16, #tpu.memory_space<vmem>>, %arg4: memref<8x1xf32, #tpu.memory_space<vmem>>, %arg5: memref<8x128xf32, #tpu.memory_space<vmem>>, %arg6: memref<8x1xf32, #tpu.memory_space<vmem>>, %arg7: memref<8x1xf32, #tpu.memory_space<vmem>>) attributes {dimension_semantics = [#tpu.dimension_semantics<parallel>, #tpu.dimension_semantics<arbitrary>], iteration_bounds = array<i64: 2, 3>, scalar_prefetch = 0 : i64, scratch_operands = 2 : i64, tpu.core_type = #tpu.core_type<tc>, window_params = [{transform_indices = @transform_0, window_bounds = array<i64: 8, 32>}, {transform_indices = @transform_1, window_bounds = array<i64: 32, 128>}, {transform_indices = @transform_2, window_bounds = array<i64: 8, 1>}, {transform_indices = @transform_3, window_bounds = array<i64: 8, 128>}]} {
    %c0_i32 = arith.constant 0 : i32
    %0 = arith.cmpi eq, %arg1, %c0_i32 : i32
    %1 = arith.extui %0 : i1 to i32
    %c0_i32_0 = arith.constant 0 : i32
    %2 = arith.cmpi ne, %1, %c0_i32_0 : i32
    scf.if %2 {
      %cst_18 = arith.constant -1.000000e+30 : f32
      %33 = vector.broadcast %cst_18 : f32 to vector<8x1xf32>
      %c0_19 = arith.constant 0 : index
      %c0_20 = arith.constant 0 : index
      %34 = vector.load %arg6[%c0_19, %c0_20] : memref<8x1xf32, #tpu.memory_space<vmem>>, vector<8x1xf32>
      tpu.vector_store %arg6[%c0_19, %c0_20], %33 {strides = array<i32>} : memref<8x1xf32, #tpu.memory_space<vmem>>, vector<8x1xf32>,
      %cst_21 = arith.constant 0.000000e+00 : f32
      %35 = vector.broadcast %cst_21 : f32 to vector<8x1xf32>
      %c0_22 = arith.constant 0 : index
      %c0_23 = arith.constant 0 : index
      %36 = vector.load %arg7[%c0_22, %c0_23] : memref<8x1xf32, #tpu.memory_space<vmem>>, vector<8x1xf32>
      tpu.vector_store %arg7[%c0_22, %c0_23], %35 {strides = array<i32>} : memref<8x1xf32, #tpu.memory_space<vmem>>, vector<8x1xf32>,
    } else {
    }
    %c0 = arith.constant 0 : index
    %c0_1 = arith.constant 0 : index
    %3 = vector.load %arg2[%c0, %c0_1] : memref<8x32xbf16, #tpu.memory_space<vmem>>, vector<8x32xbf16>
    %c0_2 = arith.constant 0 : index
    %c0_3 = arith.constant 0 : index
    %4 = vector.load %arg3[%c0_2, %c0_3] : memref<32x128xbf16, #tpu.memory_space<vmem>>, vector<32x128xbf16>
    %cst = arith.constant dense<0.000000e+00> : vector<8x128xf32>
    %5 = tpu.matmul %3, %4, %cst {dimension_numbers = #tpu.dot_dimension_numbers<[1], [0], [0], [1], [0, 0, 1, 1], [], []>} : vector<8x32xbf16>, vector<32x128xbf16>, vector<8x128xf32> -> vector<8x128xf32>
    %c128_i32 = arith.constant 128 : i32
    %6 = arith.muli %arg1, %c128_i32 : i32
    %c298_i32 = arith.constant 298 : i32
    %7 = arith.subi %c298_i32, %6 : i32
    %8 = tpu.iota {dimensions = array<i32: 1>} : vector<8x128xi32>
    %9 = vector.broadcast %7 : i32 to vector<8x128xi32>
    %10 = arith.cmpi slt, %8, %9 : vector<8x128xi32>
    %cst_4 = arith.constant -1.000000e+30 : f32
    %11 = vector.broadcast %cst_4 : f32 to vector<8x128xf32>
    %12 = arith.select %10, %5, %11 : vector<8x128xi1>, vector<8x128xf32>
    %c0_5 = arith.constant 0 : index
    %c0_6 = arith.constant 0 : index
    %13 = vector.load %arg6[%c0_5, %c0_6] : memref<8x1xf32, #tpu.memory_space<vmem>>, vector<8x1xf32>
    %cst_7 = arith.constant dense<0xFF800000> : vector<8xf32>
    %14 = vector.multi_reduction <maximumf>, %12, %cst_7 [1] : vector<8x128xf32> to vector<8xf32>
    %15 = vector.shape_cast %14 : vector<8xf32> to vector<8x1xf32>
    %16 = arith.maximumf %13, %15 : vector<8x1xf32>
    %c0_8 = arith.constant 0 : index
    %c0_9 = arith.constant 0 : index
    %17 = vector.load %arg6[%c0_8, %c0_9] : memref<8x1xf32, #tpu.memory_space<vmem>>, vector<8x1xf32>
    %18 = arith.subf %17, %16 : vector<8x1xf32>
    %19 = math.exp %18 : vector<8x1xf32>
    %c0_10 = arith.constant 0 : index
    %c0_11 = arith.constant 0 : index
    %20 = vector.load %arg7[%c0_10, %c0_11] : memref<8x1xf32, #tpu.memory_space<vmem>>, vector<8x1xf32>
    %21 = arith.mulf %19, %20 : vector<8x1xf32>
    %22 = vector.broadcast %16 : vector<8x1xf32> to vector<8x128xf32>
    %23 = arith.subf %12, %22 : vector<8x128xf32>
    %24 = math.exp %23 : vector<8x128xf32>
    %cst_12 = arith.constant dense<0.000000e+00> : vector<8xf32>
    %25 = vector.multi_reduction <add>, %24, %cst_12 [1] : vector<8x128xf32> to vector<8xf32>
    %26 = vector.shape_cast %25 : vector<8xf32> to vector<8x1xf32>
    %27 = arith.addf %21, %26 : vector<8x1xf32>
    %c0_13 = arith.constant 0 : index
    %c0_14 = arith.constant 0 : index
    %28 = vector.load %arg7[%c0_13, %c0_14] : memref<8x1xf32, #tpu.memory_space<vmem>>, vector<8x1xf32>
    tpu.vector_store %arg7[%c0_13, %c0_14], %27 {strides = array<i32>} : memref<8x1xf32, #tpu.memory_space<vmem>>, vector<8x1xf32>,
    %c0_15 = arith.constant 0 : index
    %c0_16 = arith.constant 0 : index
    %29 = vector.load %arg6[%c0_15, %c0_16] : memref<8x1xf32, #tpu.memory_space<vmem>>, vector<8x1xf32>
    tpu.vector_store %arg6[%c0_15, %c0_16], %16 {strides = array<i32>} : memref<8x1xf32, #tpu.memory_space<vmem>>, vector<8x1xf32>,
    %c2_i32 = arith.constant 2 : i32
    %30 = arith.cmpi eq, %arg1, %c2_i32 : i32
    %31 = arith.extui %30 : i1 to i32
    %c0_i32_17 = arith.constant 0 : i32
    %32 = arith.cmpi ne, %31, %c0_i32_17 : i32
    scf.if %32 {
      %c0_18 = arith.constant 0 : index
      %c0_19 = arith.constant 0 : index
      %33 = vector.load %arg6[%c0_18, %c0_19] : memref<8x1xf32, #tpu.memory_space<vmem>>, vector<8x1xf32>
      %c0_20 = arith.constant 0 : index
      %c0_21 = arith.constant 0 : index
      %34 = vector.load %arg7[%c0_20, %c0_21] : memref<8x1xf32, #tpu.memory_space<vmem>>, vector<8x1xf32>
      %35 = math.log %34 : vector<8x1xf32>
      %36 = arith.addf %33, %35 : vector<8x1xf32>
      %c0_22 = arith.constant 0 : index
      %c0_23 = arith.constant 0 : index
      %37 = vector.load %arg4[%c0_22, %c0_23] : memref<8x1xf32, #tpu.memory_space<vmem>>, vector<8x1xf32>
      %38 = arith.mulf %37, %36 : vector<8x1xf32>
      %39 = vector.shape_cast %38 : vector<8x1xf32> to vector<1x8x1xf32>
      %cst_24 = arith.constant dense<0.000000e+00> : vector<1xf32>
      %40 = vector.multi_reduction <add>, %39, %cst_24 [1, 2] : vector<1x8x1xf32> to vector<1xf32>
      %41 = vector.shape_cast %40 : vector<1xf32> to vector<1x1x1xf32>
      %42 = vector.extract %41[0, 0, 0] : f32 from vector<1x1x1xf32>
      %cst_25 = arith.constant 0.000000e+00 : f32
      %43 = vector.broadcast %cst_25 : f32 to vector<8x128xf32>
      %44 = vector.broadcast %42 : f32 to vector<8x128xf32>
      %45 = arith.addf %44, %43 : vector<8x128xf32>
      %c0_26 = arith.constant 0 : index
      %c0_27 = arith.constant 0 : index
      %46 = vector.load %arg5[%c0_26, %c0_27] : memref<8x128xf32, #tpu.memory_space<vmem>>, vector<8x128xf32>
      tpu.vector_store %arg5[%c0_26, %c0_27], %45 {strides = array<i32>} : memref<8x128xf32, #tpu.memory_space<vmem>>, vector<8x128xf32>,
    } else {
    }
    return
  }
  func.func @transform_0(%arg0: i32, %arg1: i32) -> (i32, i32) {
    %c0_i32 = arith.constant 0 : i32
    %c0_i32_0 = arith.constant 0 : i32
    return %arg0, %c0_i32 : i32, i32
  }
  func.func @transform_1(%arg0: i32, %arg1: i32) -> (i32, i32) {
    %c0_i32 = arith.constant 0 : i32
    %c0_i32_0 = arith.constant 0 : i32
    return %c0_i32, %arg1 : i32, i32
  }
  func.func @transform_2(%arg0: i32, %arg1: i32) -> (i32, i32) {
    %c0_i32 = arith.constant 0 : i32
    %c0_i32_0 = arith.constant 0 : i32
    return %arg0, %c0_i32 : i32, i32
  }
  func.func @transform_3(%arg0: i32, %arg1: i32) -> (i32, i32) {
    %c0_i32 = arith.constant 0 : i32
    %c0_i32_0 = arith.constant 0 : i32
    return %arg0, %c0_i32 : i32, i32
  }
}

</mosaic_0001>

<llo_original>
// kernel: tpu_custom_call.1
$region0: #{tpu_custom_call.1}
  #allocation0 [shape = 'u32[]', space=smem, size = 0x4, offset = 0x4, fixed_abs, tag = 'smem constant byte address 0x4 - core index']
  #allocation1 [shape = 'u32[144,128]{1,0:T(1,128)}', space=vmem, size = 0x12000, scoped, tag = 'internal scratch']
  #allocation2 [shape = 'f32[8,1]{1,0:T(8,128)}', space=vmem, size = 0x1000, scoped, tag = 'scratch operand']
  #allocation3 [shape = 'f32[8,1]{1,0:T(8,128)}', space=vmem, size = 0x1000, scoped, tag = 'scratch operand']
  %s0 = inlined_call_operand.vmem [shape: bf16[16,32], index: 0, kind: input, shape index: {}]
  %s1 = inlined_call_operand.hbm [shape: bf16[32,384], index: 1, kind: input, shape index: {}]
  %s2 = inlined_call_operand.vmem [shape: f32[16,1], index: 2, kind: input, shape index: {}]
  %s3 = inlined_call_operand.hbm [shape: f32[16,128], index: 3, kind: output, shape index: {}]
  %s4 = sld [smem:[#allocation0]]
  $region57: #{tpu_custom_call.1} parent=0
    _
  %s6 = ssub.s32 1, %s4
  %s7 = scalar_select 0, %s6, %s4
  $region1: #{tpu_custom_call.1} parent=0
    #allocation4 [shape = 'u8[16384]{0}', space=vmem, size = 0x4000, scoped, tag = 'input window, operand 1']
    #allocation5 [shape = 's32[2]{0}', space=sflag, size = 0x8, scoped, tag = 'scoped memory for tpu_custom_call.1']
    #allocation6 [shape = 's32[2]{0}', space=sflag, size = 0x8, scoped, tag = 'scoped memory for tpu_custom_call.1']
    #allocation7 [shape = 'u8[8192]{0}', space=vmem, size = 0x2000, scoped, tag = 'output window, operand 0']
    %8 = vsyncpa [#allocation5], 0
    %s9 = scalar_lea.sflag [#allocation5], 1
    %10 = vsyncpa %s9, 0
    %11 = vsyncpa [#allocation6], 0
    %s12 = scalar_lea.sflag [#allocation6], 1
    %13 = vsyncpa %s12, 0
    loop: start=0, step=1, limit=8
    $region2: #{tpu_custom_call.1} parent=1 // loop_pre_header
      _
    $region3: #{tpu_custom_call.1} parent=1 // loop_header
      %s15 = sphi 0, %s19
      %p16 = scmp.ge.s32.totalorder %s15, 8
      %s22 = sphi 0, %s34
      %s23 = sphi 0, %s30
      %s24 = sphi 0, %s22
      %s25 = sphi 0, %s23
      %s26 = sphi 0, %s24
      %s27 = sphi 0, %s25
      %s37 = sphi 0, %s39
      %s40 = sphi 0, %s37
      %s41 = sphi 0, %s40
      %s57 = sphi 0, %s41
      %s63 = sphi 0, %s65
      %s66 = sphi 0, %s63
      %s67 = sphi 0, %s66
      %s83 = sphi 0, %s67
      %s89 = sphi 0, %s91
      %s92 = sphi 0, %s89
      %s93 = sphi 0, %s92
      %s109 = sphi 0, %s93
      %s115 = sphi 0, %s117
      %s118 = sphi 0, %s115
      %s119 = sphi 0, %s118
      %s135 = sphi 0, %s119
    $region4: #{tpu_custom_call.1} parent=1 // loop_header_branch
      %18 = sbr.rel (%p16) target = $region8
    $region5: #{tpu_custom_call.1} parent=1 // loop_body
      %s20 = ssub.s32 %s15, 1
      %s21 = ssub.s32 %s15, 2
      %s28 = sadd.s32 1, %s23
      %p29 = scmp.ge.s32.totalorder %s28, 3
      %s30 = scalar_select %p29, 0, %s28
      %s31 = sadd.s32 1, %s22
      %s32 = scalar_select %p29, %s31, %s22
      %p33 = scmp.ge.s32.totalorder %s32, 2
      %s34 = scalar_select %p33, 0, %s32
      %s35 = ssub.s32 %s22, %s34
      %p36 = scmp.eq.s32.totalorder %s35, 0
      %s38 = sadd.s32 %s37, 1
      %s39 = scalar_select %p36, %s37, %s38
      %p42 = pneg %p36
      %p43 = scmp.eq.s32.totalorder %s15, 5
      %p44 = por %p42, %p43
      %p45 = scmp.ne.s32.totalorder %s37, %s40
      %p46 = scmp.eq.s32.totalorder %s15, 0
      %p47 = por %p45, %p46
      %p48 = scmp.ne.s32.totalorder %s37, %s40
      %p49 = scmp.eq.s32.totalorder %s20, 5
      %p50 = por %p48, %p49
      %p51 = scmp.ne.s32.totalorder %s40, %s41
      %p52 = scmp.eq.s32.totalorder %s20, 0
      %p53 = por %p51, %p52
      %p54 = scmp.ne.s32.totalorder %s40, %s41
      %p55 = scmp.eq.s32.totalorder %s21, 5
      %p56 = por %p54, %p55
      %p58 = scmp.ne.s32.totalorder %s41, %s57
      %p59 = scmp.eq.s32.totalorder %s21, 0
      %p60 = por %p58, %p59
      %s61 = ssub.s32 %s23, %s30
      %p62 = scmp.eq.s32.totalorder %s61, 0
      %s64 = sadd.s32 %s63, 1
      %s65 = scalar_select %p62, %s63, %s64
      %p68 = pneg %p62
      %p69 = scmp.eq.s32.totalorder %s15, 5
      %p70 = por %p68, %p69
      %p71 = scmp.ne.s32.totalorder %s63, %s66
      %p72 = scmp.eq.s32.totalorder %s15, 0
      %p73 = por %p71, %p72
      %p74 = scmp.ne.s32.totalorder %s63, %s66
      %p75 = scmp.eq.s32.totalorder %s20, 5
      %p76 = por %p74, %p75
      %p77 = scmp.ne.s32.totalorder %s66, %s67
      %p78 = scmp.eq.s32.totalorder %s20, 0
      %p79 = por %p77, %p78
      %p80 = scmp.ne.s32.totalorder %s66, %s67
      %p81 = scmp.eq.s32.totalorder %s21, 5
      %p82 = por %p80, %p81
      %p84 = scmp.ne.s32.totalorder %s67, %s83
      %p85 = scmp.eq.s32.totalorder %s21, 0
      %p86 = por %p84, %p85
      %s87 = ssub.s32 %s22, %s34
      %p88 = scmp.eq.s32.totalorder %s87, 0
      %s90 = sadd.s32 %s89, 1
      %s91 = scalar_select %p88, %s89, %s90
      %p94 = pneg %p88
      %p95 = scmp.eq.s32.totalorder %s15, 5
      %p96 = por %p94, %p95
      %p97 = scmp.ne.s32.totalorder %s89, %s92
      %p98 = scmp.eq.s32.totalorder %s15, 0
      %p99 = por %p97, %p98
      %p100 = scmp.ne.s32.totalorder %s89, %s92
      %p101 = scmp.eq.s32.totalorder %s20, 5
      %p102 = por %p100, %p101
      %p103 = scmp.ne.s32.totalorder %s92, %s93
      %p104 = scmp.eq.s32.totalorder %s20, 0
      %p105 = por %p103, %p104
      %p106 = scmp.ne.s32.totalorder %s92, %s93
      %p107 = scmp.eq.s32.totalorder %s21, 5
      %p108 = por %p106, %p107
      %p110 = scmp.ne.s32.totalorder %s93, %s109
      %p111 = scmp.eq.s32.totalorder %s21, 0
      %p112 = por %p110, %p111
      %s113 = ssub.s32 %s22, %s34
      %p114 = scmp.eq.s32.totalorder %s113, 0
      %s116 = sadd.s32 %s115, 1
      %s117 = scalar_select %p114, %s115, %s116
      %p120 = pneg %p114
      %p121 = scmp.eq.s32.totalorder %s15, 5
      %p122 = por %p120, %p121
      %p123 = scmp.ne.s32.totalorder %s115, %s118
      %p124 = scmp.eq.s32.totalorder %s15, 0
      %p125 = por %p123, %p124
      %p126 = scmp.ne.s32.totalorder %s115, %s118
      %p127 = scmp.eq.s32.totalorder %s20, 5
      %p128 = por %p126, %p127
      %p129 = scmp.ne.s32.totalorder %s118, %s119
      %p130 = scmp.eq.s32.totalorder %s20, 0
      %p131 = por %p129, %p130
      %p132 = scmp.ne.s32.totalorder %s118, %s119
      %p133 = scmp.eq.s32.totalorder %s21, 5
      %p134 = por %p132, %p133
      %p136 = scmp.ne.s32.totalorder %s119, %s135
      %p137 = scmp.eq.s32.totalorder %s21, 0
      %p138 = por %p136, %p137
      %p139 = scmp.le.s32.totalorder 1, %s15
      %p140 = scmp.lt.s32.totalorder %s15, 7
      %p141 = pnand %p139, %p140
      %p142 = pneg %p141
      // Predicated region
      $region9: #{tpu_custom_call.1} parent=5 // pred_check
        _
      $region10: #{tpu_custom_call.1} parent=5 // pred_check_branch
        %144 = sbr.rel (%p141) target = $region12
      $region11: #{tpu_custom_call.1} parent=5 // pred_region
        %s145 = ssub.s32 %s15, 1
      $region12: #{tpu_custom_call.1} parent=5 // pred_fallthru
        _
      %p146 = scmp.lt.s32.totalorder %s15, 6
      // Predicated region
      $region13: #{tpu_custom_call.1} parent=5 // pred_check
        %p147 = pneg %p146
      $region14: #{tpu_custom_call.1} parent=5 // pred_check_branch
        %149 = sbr.rel (%p147) target = $region16
      $region15: #{tpu_custom_call.1} parent=5 // pred_region
        // Predicated region
        $region17: #{tpu_custom_call.1} parent=15 // pred_check
          %p150 = pneg %p47
        $region18: #{tpu_custom_call.1} parent=15 // pred_check_branch
          %152 = sbr.rel (%p150) target = $region20
        $region19: #{tpu_custom_call.1} parent=15 // pred_region
          %p153 = scmp.lt.s32.totalorder %s22, 1
          %s154 = scalar_select %p153, %s22, 1
          %s155 = smul.addr %s154, 4
          %s156 = scalar_lea.vmem %s0, %s155
        $region20: #{tpu_custom_call.1} parent=15 // pred_fallthru
          _
        // Predicated region
        $region21: #{tpu_custom_call.1} parent=15 // pred_check
          %p157 = pneg %p73
        $region22: #{tpu_custom_call.1} parent=15 // pred_check_branch
          %159 = sbr.rel (%p157) target = $region24
        $region23: #{tpu_custom_call.1} parent=15 // pred_region
          %s160 = sand.u32 %s63, 1
          %s161 = scalar_lea.sflag [#allocation5], %s160
          %s162 = sand.u32 %s63, 1
          %s163 = smul.addr %s162, 16
          %s164 = scalar_lea.vmem [#allocation4], %s163
          %s166 = ssub.s32 256, 256
          %167 = vsyncadd %s161, %s166
          %s168 = smul.addr %s23, 64
          %s169 = scalar_lea.hbm %s1, %s168
          %s170 = sshll.u32 %s164, 4
          %s171 = int_to_ptr.vmem [resolvable:$true] %s170
          %176 = dma.hbm_to_vmem [thread:$0]  %s169, 256, %s171, %s161, 192, 64, 4
        $region24: #{tpu_custom_call.1} parent=15 // pred_fallthru
          _
        // Predicated region
        $region25: #{tpu_custom_call.1} parent=15 // pred_check
          %p177 = pneg %p99
        $region26: #{tpu_custom_call.1} parent=15 // pred_check_branch
          %179 = sbr.rel (%p177) target = $region28
        $region27: #{tpu_custom_call.1} parent=15 // pred_region
          %p180 = scmp.lt.s32.totalorder %s22, 1
          %s181 = scalar_select %p180, %s22, 1
          %s182 = smul.addr %s181, 8
          %s183 = scalar_lea.vmem %s2, %s182
        $region28: #{tpu_custom_call.1} parent=15 // pred_fallthru
          _
      $region16: #{tpu_custom_call.1} parent=5 // pred_fallthru
        _
      %p184 = scmp.le.s32.totalorder 1, %s15
      %p185 = scmp.lt.s32.totalorder %s15, 7
      %p186 = pnand %p184, %p185
      %p187 = pneg %p186
      // Predicated region
      $region29: #{tpu_custom_call.1} parent=5 // pred_check
        _
      $region30: #{tpu_custom_call.1} parent=5 // pred_check_branch
        %189 = sbr.rel (%p186) target = $region32
      $region31: #{tpu_custom_call.1} parent=5 // pred_region
        %s190 = ssub.s32 %s15, 1
        %s191 = sand.u32 %s66, 1
        %s192 = scalar_lea.sflag [#allocation5], %s191
        %s193 = sand.u32 %s66, 1
        %s194 = smul.addr %s193, 16
        %s195 = scalar_lea.vmem [#allocation4], %s194
        // Predicated region
        $region33: #{tpu_custom_call.1} parent=31 // pred_check
          %p196 = pneg %p79
        $region34: #{tpu_custom_call.1} parent=31 // pred_check_branch
          %198 = sbr.rel (%p196) target = $region36
        $region35: #{tpu_custom_call.1} parent=31 // pred_region
          %199 = dma.done %s192, 256
        $region36: #{tpu_custom_call.1} parent=31 // pred_fallthru
          _
        %p200 = scmp.lt.s32.totalorder %s24, 1
        %s201 = scalar_select %p200, %s24, 1
        %s202 = smul.addr %s201, 4
        %s203 = scalar_lea.vmem %s0, %s202
        %p204 = pneg %p53
        %p205 = pneg %p50
        %s206 = sand.u32 %s66, 1
        %s207 = scalar_lea.sflag [#allocation5], %s206
        %s208 = sand.u32 %s66, 1
        %s209 = smul.addr %s208, 16
        %s210 = scalar_lea.vmem [#allocation4], %s209
        %p211 = pneg %p79
        %p212 = pneg %p76
        %p213 = scmp.lt.s32.totalorder %s24, 1
        %s214 = scalar_select %p213, %s24, 1
        %s215 = smul.addr %s214, 8
        %s216 = scalar_lea.vmem %s2, %s215
        %p217 = pneg %p105
        %p218 = pneg %p102
        %p219 = pneg %p131
        %p220 = pneg %p128
        %s221 = sand.u32 %s118, 1
        %s222 = scalar_lea.sflag [#allocation6], %s221
        %s223 = sand.u32 %s118, 1
        %s224 = smul.addr %s223, 8
        %s225 = scalar_lea.vmem [#allocation7], %s224
        %p226 = scmp.lt.s32.totalorder %s24, 1
        %s227 = scalar_select %p226, %s24, 1
        %s228 = smul.addr %s227, 4
        %s229 = scalar_lea.vmem %s0, %s228
        %p230 = scmp.lt.s32.totalorder %s24, 1
        %s231 = scalar_select %p230, %s24, 1
        %s232 = smul.addr %s231, 8
        %s233 = scalar_lea.vmem %s2, %s232
        %p235 = scmp.eq.s32.totalorder %s25, 0
        // Predicated region
        $region37: #{tpu_custom_call.1} parent=31 // pred_check
          %p236 = pneg %p235
        $region38: #{tpu_custom_call.1} parent=31 // pred_check_branch
          %238 = sbr.rel (%p236) target = $region40
        $region39: #{tpu_custom_call.1} parent=31 // pred_region
          %vm239 = vcmask 7168
          %240 = vst.msk [vmem:[#allocation2] sm:$0xff] %vm239, -1e+30
          %241 = vst.msk [vmem:[#allocation3] sm:$0xff] %vm239, 0.0
        $region40: #{tpu_custom_call.1} parent=31 // pred_fallthru
          _
        %v242 = vld [vmem:[%s229] sm:$0xf]
        %v243 = vld [vmem:[%s195] sm:$0xf]
        %v244 = vld [vmem:[%s195 + $0x4] sm:$0xf]
        %v245 = vld [vmem:[%s195 + $0x8] sm:$0xf]
        %v246 = vld [vmem:[%s195 + $0xc] sm:$0xf]
        %v251 = vunpack.c.l.b16 %v243
        %v252 = vunpack.c.l.b16 %v244
        %v253 = vunpack.c.l.b16 %v245
        %v254 = vunpack.c.l.b16 %v246
        %v255 = vpack.c.b16 %v252, %v251
        %v256 = vpack.c.b16 %v254, %v253
        %vm259 = vcmask 261120
        %v261 = vsel %vm259, %v242, 0
        %263 = vmatprep.subr.bf16.mxu0 0
        %264 = vmatpush1.bf16.msra.mxu0 %v255
        %265 = vmatprep.subr.bf16.mxu0 0
        %266 = vmatpush1.bf16.msra.mxu0 %v256
        %267 = vmatprep.subr.bf16.mxu0 0
        %268 = vmatpush1.bf16.msra.mxu0 0
        %269 = vmatprep.subr.bf16.mxu0 0
        %270 = vmatpush1.bf16.msra.mxu0 0
        %271 = vmatprep.subr.bf16.mxu0 0
        %272 = vmatpush1.bf16.msra.mxu0 0
        %273 = vmatprep.subr.bf16.mxu0 0
        %274 = vmatpush1.bf16.msra.mxu0 0
        %275 = vmatprep.subr.bf16.mxu0 0
        %276 = vmatpush1.bf16.msra.mxu0 0
        %277 = vmatprep.subr.bf16.mxu0 0
        %278 = vmatpush1.bf16.msra.mxu0 0
        %279 = vmatprep.subr.bf16.mxu0 0
        %280 = vmatpush1.bf16.msra.mxu0 0
        %281 = vmatprep.subr.bf16.mxu0 0
        %282 = vmatpush1.bf16.msra.mxu0 0
        %283 = vmatprep.subr.bf16.mxu0 0
        %284 = vmatpush1.bf16.msra.mxu0 0
        %285 = vmatprep.subr.bf16.mxu0 0
        %286 = vmatpush1.bf16.msra.mxu0 0
        %287 = vmatprep.subr.bf16.mxu0 0
        %288 = vmatpush1.bf16.msra.mxu0 0
        %289 = vmatprep.subr.bf16.mxu0 0
        %290 = vmatpush1.bf16.msra.mxu0 0
        %291 = vmatprep.subr.bf16.mxu0 0
        %292 = vmatpush1.bf16.msra.mxu0 0
        %293 = vmatprep.subr.bf16.mxu0 0
        %294 = vmatpush1.bf16.msra.mxu0 0
        %295 = vmatprep.mubr.bf16.mxu0 0
        %296 = vmatmul.mubr.bf16.gmra.mrb[0].mxu0 %v261
        %v297 = vpop.f32.mrb[0].mxu0
        %v298 = vadd.f32 0.0, %v297
        %v299 = vpop.f32.mrb[0].mxu0
        %v300 = vpop.f32.mrb[0].mxu0
        %v301 = vpop.f32.mrb[0].mxu0
        %302 = vdwg.mxu0
        %s303 = smul.u32 %s25, 128
        %s304 = ssub.s32 298, %s303
        %v305 = vlaneseq
        %v306 = vand.u32 %v305, 127
        %v307 = vstv %s304
        %vm308 = vcmp.lt.s32.totalorder %v306, %v307
        %v309 = vsel %vm308, %v298, -1e+30
        %v310 = vld [vmem:[#allocation2] sm:$0xff]
        %311 = vmax.xlane.f32.xlu0 %v309
        %v312 = vpop.xlane.xlu0 %311
        %v313 = vmax.f32 %v310, %v312
        %v314 = vsub.f32 %v310, %v313
        %v315 = vmul.f32 %v314, 1.442695
        %v316 = vpow.pop %v315
        %v317 = vld [vmem:[#allocation3] sm:$0xff]
        %v318 = vmul.f32 %v316, %v317
        %320 = vset.pattern.permute.xlu0 0
        %321 = vperm.xlu0 %320, %v313
        %v322 = vpop.permute.xlu0 %321
        %v324 = vsub.f32 %v309, %v322
        %v325 = vmul.f32 %v324, 1.442695
        %v326 = vpow.pop %v325
        %327 = vadd.xlane.f32.xlu0 %v326
        %v328 = vpop.xlane.xlu0 %327
        %v329 = vadd.f32 %v318, %v328
        %vm330 = vcmask 7168
        %331 = vst.msk [vmem:[#allocation3] sm:$0xff] %vm330, %v329
        %332 = vst.msk [vmem:[#allocation2] sm:$0xff] %vm330, %v313
        %p333 = scmp.eq.s32.totalorder %s25, 2
        // Predicated region
        $region41: #{tpu_custom_call.1} parent=31 // pred_check
          %p334 = pneg %p333
        $region42: #{tpu_custom_call.1} parent=31 // pred_check_branch
          %336 = sbr.rel (%p334) target = $region44
        $region43: #{tpu_custom_call.1} parent=31 // pred_region
          %v337 = vld [vmem:[#allocation2] sm:$0xff]
          %v338 = vld [vmem:[#allocation3] sm:$0xff]
          %v339 = vlog2.pop %v338
          %v340 = vmul.f32 %v339, 0.6931472
          %v341 = vadd.f32 %v337, %v340
          %v342 = vld [vmem:[%s233] sm:$0xff]
          %v343 = vmul.f32 %v342, %v341
          %v344 = vsel %vm330, %v343, 0.0
          %345 = vadd.xlane.f32.xlu0 %v344
          %v346 = vpop.xlane.xlu0 %345
          %v347 = vrot.slane %v346, 4
          %v348 = vadd.f32 %v346, %v347
          %v349 = vrot.slane %v348, 2
          %v350 = vadd.f32 %v348, %v349
          %v351 = vrot.slane %v350, 1
          %v352 = vadd.f32 %v350, %v351
          %s353 = vtos %v352
          %v354 = vstv %s353
          %v355 = vadd.f32 %v354, 0.0
          %356 = vst [vmem:[%s225] sm:$0xff] %v355
        $region44: #{tpu_custom_call.1} parent=31 // pred_fallthru
          _
        %s357 = sand.u32 %s118, 1
        %s358 = scalar_lea.sflag [#allocation6], %s357
        %s359 = sand.u32 %s118, 1
        %s360 = smul.addr %s359, 8
        %s361 = scalar_lea.vmem [#allocation7], %s360
        // Predicated region
        $region45: #{tpu_custom_call.1} parent=31 // pred_check
          %p362 = pneg %p128
        $region46: #{tpu_custom_call.1} parent=31 // pred_check_branch
          %364 = sbr.rel (%p362) target = $region48
        $region47: #{tpu_custom_call.1} parent=31 // pred_region
          %s366 = ssub.s32 128, 128
          %367 = vsyncadd %s358, %s366
          %s368 = smul.addr %s24, 128
          %s369 = scalar_lea.hbm %s3, %s368
          %s371 = sshll.u32 %s361, 4
          %s372 = int_to_ptr.vmem [resolvable:$true] %s371
          %374 = dma.vmem_to_hbm [thread:$0]  %s372, 128, %s369, %s358
        $region48: #{tpu_custom_call.1} parent=31 // pred_fallthru
          _
      $region32: #{tpu_custom_call.1} parent=5 // pred_fallthru
        _
      %p375 = scmp.le.s32.totalorder 2, %s15
      // Predicated region
      $region49: #{tpu_custom_call.1} parent=5 // pred_check
        %p376 = pneg %p375
      $region50: #{tpu_custom_call.1} parent=5 // pred_check_branch
        %378 = sbr.rel (%p376) target = $region52
      $region51: #{tpu_custom_call.1} parent=5 // pred_region
        %s379 = ssub.s32 %s15, 2
        // Predicated region
        $region53: #{tpu_custom_call.1} parent=51 // pred_check
          %p380 = pneg %p134
        $region54: #{tpu_custom_call.1} parent=51 // pred_check_branch
          %382 = sbr.rel (%p380) target = $region56
        $region55: #{tpu_custom_call.1} parent=51 // pred_region
          %s383 = sand.u32 %s119, 1
          %s384 = scalar_lea.sflag [#allocation6], %s383
          %s385 = sand.u32 %s119, 1
          %s386 = smul.addr %s385, 8
          %s387 = scalar_lea.vmem [#allocation7], %s386
          %388 = dma.done %s384, 128
        $region56: #{tpu_custom_call.1} parent=51 // pred_fallthru
          _
      $region52: #{tpu_custom_call.1} parent=5 // pred_fallthru
        _
    $region6: #{tpu_custom_call.1} parent=1 // loop_footer
      %s19 = sadd.s32 1, %s15
    $region7: #{tpu_custom_call.1} parent=1 // loop_footer_branch
      %14 = sbr.rel target = $region3
    $region8: #{tpu_custom_call.1} parent=1 // loop_exit
      _
    %389 = vsyncpa [#allocation5], 1
    %s390 = scalar_lea.sflag [#allocation5], 1
    %391 = vsyncpa %s390, 1
    %392 = vsyncpa [#allocation6], 1
    %s393 = scalar_lea.sflag [#allocation6], 1
    %394 = vsyncpa %s393, 1

</llo_original>
